<compile_context>
chip_gen: v7x
topology: tpu7x:2x2x1
jax: 0.10.0
libtpu: 0.0.40
codegen_flags: <defaults>
</compile_context>

<pallas_src>
import functools

import jax
import jax.numpy as jnp
import numpy as np
from jax.experimental import pallas as pl
from jax.experimental.pallas import tpu as pltpu


def _round_up(x, m):
    return (x + m - 1) // m * m


def _vmem_limit_bytes(block_rows, kc, cpad, mxu_bytes):
    """Scoped-VMEM budget for one grid step (2-deep pipelined tiles)."""
    need = 2 * block_rows * kc * mxu_bytes      # patches tile, double-buffered
    need += 2 * block_rows * cpad * 4           # f32 output tile, double-buffered
    need += 2 * kc * cpad * mxu_bytes           # folded weight (conservative x2)
    need += 8 * cpad * 4 * 4                    # scale/shift/stats slabs (padded)
    # 2x headroom for compiler temporaries; stay under v7x's 64 MiB physical
    # VMEM (v5e scoped default is only 16 MiB, so raise it explicitly).
    return int(min(max(2 * need, 4 << 20), 48 << 20))


# --------------------- pass 1: BN partial stats (no conv writeback) ----------
def stats_kernel(patches_ref, w_ref, stats_ref):
    # patches_ref: (TM, KCp)    one row tile of the folded im2col matrix
    # w_ref:       (KCp, Cpad)  folded weight (same block every grid step)
    # stats_ref:   (1, 2, Cpad) sublane 0: channel sum, sublane 1: sum of squares
    acc = jnp.dot(patches_ref[...], w_ref[...],
                  preferred_element_type=jnp.float32)        # single MXU matmul
    # Tiling-pad rows of `patches` are zero -> their conv rows are exactly 0 and
    # contribute nothing to the batch statistics (no row mask needed).
    s = jnp.sum(acc, axis=0, keepdims=True)                  # (1, Cpad)
    ss = jnp.sum(acc * acc, axis=0, keepdims=True)           # (1, Cpad)
    stats_ref[...] = jnp.concatenate([s, ss], axis=0)[None, :, :]


# ------------- pass 2: recompute conv, fused BN FMA + LeakyReLU --------------
def conv_bn_lrelu_kernel(patches_ref, w_ref, scale_ref, shift_ref, out_ref, *,
                         neg_slope):
    acc = jnp.dot(patches_ref[...], w_ref[...],
                  preferred_element_type=jnp.float32)        # same MXU matmul
    y = acc * scale_ref[...] + shift_ref[...]                # folded BN FMA
    out_ref[...] = jnp.where(y >= 0, y, neg_slope * y).astype(out_ref.dtype)


# ------------------------------- wrapper -------------------------------------
def conv_block_forward(x_nchw, weight_oihw, bias, gamma, beta, *, pad, dil,
                       eps=1e-5, neg_slope=0.01, block_rows=512,
                       mxu_dtype=jnp.float32, kc_align=8):
    # `bias` accepted for nn.Conv2d API parity but intentionally unused: a conv
    # bias before training-mode BatchNorm is cancelled by the batch-mean
    # subtraction.  Reinstate it if running with eval-mode (running) stats.
    del bias
    N, Cin, H, W = x_nchw.shape
    Cout, _, KH, KW = weight_oihw.shape
    Hout = H + 2 * pad - dil * (KH - 1)
    Wout = W + 2 * pad - dil * (KW - 1)
    n_rows = N * Hout * Wout
    KC = KH * KW * Cin
    KCp = _round_up(KC, kc_align)            # set kc_align=128 for large Cin
    Cpad = _round_up(Cout, 128)              # lane-dense channel axis
    rows_pad = _round_up(n_rows, block_rows)
    n_tiles = rows_pad // block_rows
    mxu_bytes = jnp.dtype(mxu_dtype).itemsize

    # ---- glue: NCHW -> NHWC, pad, folded im2col (taps merged into K) ----
    # TODO(synk): keep the op NHWC end-to-end in the surrounding model to drop
    # both transposes (each is a full HBM round trip in XLA glue).
    x_nhwc = jnp.transpose(x_nchw, (0, 2, 3, 1))
    xp = jnp.pad(x_nhwc, ((0, 0), (pad, pad), (pad, pad), (0, 0)))
    taps = []
    for kh in range(KH):
        for kw in range(KW):
            sl = xp[:, kh * dil:kh * dil + Hout, kw * dil:kw * dil + Wout, :]
            taps.append(sl.reshape(n_rows, Cin))
    patches = jnp.concatenate(taps, axis=1)                  # (n_rows, KH*KW*Cin)
    patches = jnp.pad(patches,
                      ((0, rows_pad - n_rows), (0, KCp - KC))).astype(mxu_dtype)

    # weights OIHW -> (KH*KW*Cin, Cout), zero-padded to (KCp, Cpad).
    w_mat = jnp.transpose(weight_oihw, (2, 3, 1, 0)).reshape(KC, Cout)
    w_mat = jnp.pad(w_mat, ((0, KCp - KC), (0, Cpad - Cout))).astype(mxu_dtype)

    vmem_limit = _vmem_limit_bytes(block_rows, KCp, Cpad, mxu_bytes)
    cparams = pltpu.CompilerParams(dimension_semantics=("parallel",),
                                   vmem_limit_bytes=vmem_limit)

    # ---- pass 1: per-tile BN partial statistics ----
    stats = pl.pallas_call(
        stats_kernel,
        grid=(n_tiles,),
        in_specs=[pl.BlockSpec((block_rows, KCp), lambda i: (i, 0)),
                  pl.BlockSpec((KCp, Cpad), lambda i: (0, 0))],
        out_specs=pl.BlockSpec((1, 2, Cpad), lambda i: (i, 0, 0)),
        out_shape=jax.ShapeDtypeStruct((n_tiles, 2, Cpad), jnp.float32),
        compiler_params=cparams,
    )(patches, w_mat)

    # ---- tiny glue: reduce partial stats, fold BN affine into one FMA ----
    tot = jnp.sum(stats[:, 0, :], axis=0)                    # (Cpad,)
    tot_sq = jnp.sum(stats[:, 1, :], axis=0)                 # (Cpad,)
    mean = tot / n_rows
    # TODO(synk): E[x^2]-E[x]^2 in f32 can cancel when |mean| >> std; switch to
    # a shifted / Welford accumulation if conv activations drift far from zero.
    var = jnp.maximum(tot_sq / n_rows - mean * mean, 0.0)    # biased variance
    g = jnp.pad(gamma.astype(jnp.float32), (0, Cpad - Cout))
    b = jnp.pad(beta.astype(jnp.float32), (0, Cpad - Cout))
    scale = (g * jax.lax.rsqrt(var + eps)).reshape(1, Cpad)
    shift = (b - mean * scale[0]).reshape(1, Cpad)

    # ---- pass 2: recompute conv tile, BN FMA, LeakyReLU ----
    out_flat = pl.pallas_call(
        functools.partial(conv_bn_lrelu_kernel, neg_slope=neg_slope),
        grid=(n_tiles,),
        in_specs=[pl.BlockSpec((block_rows, KCp), lambda i: (i, 0)),
                  pl.BlockSpec((KCp, Cpad), lambda i: (0, 0)),
                  pl.BlockSpec((1, Cpad), lambda i: (0, 0)),
                  pl.BlockSpec((1, Cpad), lambda i: (0, 0))],
        out_specs=pl.BlockSpec((block_rows, Cpad), lambda i: (i, 0)),
        out_shape=jax.ShapeDtypeStruct((rows_pad, Cpad), jnp.float32),
        compiler_params=cparams,
    )(patches, w_mat, scale, shift)

    # ---- glue: drop row/channel padding, back to NCHW ----
    out = out_flat[:n_rows, :Cout].reshape(N, Hout, Wout, Cout)
    return jnp.transpose(out, (0, 3, 1, 2))


# ------------------------------ reference ------------------------------------
def conv_block_reference(x, w, b, gamma, beta, *, pad, dil, eps=1e-5, slope=0.01):
    y = jax.lax.conv_general_dilated(
        x, w, window_strides=(1, 1), padding=((pad, pad), (pad, pad)),
        rhs_dilation=(dil, dil),
        dimension_numbers=('NCHW', 'OIHW', 'NCHW')) + b.reshape(1, -1, 1, 1)
    mean = y.mean(axis=(0, 2, 3), keepdims=True)
    var = ((y - mean) ** 2).mean(axis=(0, 2, 3), keepdims=True)
    yhat = (y - mean) / jnp.sqrt(var + eps)
    ybn = yhat * gamma.reshape(1, -1, 1, 1) + beta.reshape(1, -1, 1, 1)
    return jnp.where(ybn >= 0, ybn, slope * ybn)


# --------------------------------- main ---------------------------------------
if __name__ == "__main__":
    # Module config consistent with ConvBlock(in_ch, out_ch, k_size, pad, dil)
    in_ch, out_ch, k_size, pad, dil = 4, 8, 3, 2, 2
    N, H, W = 2, 16, 16

    key = jax.random.PRNGKey(0)
    kx, kw, kb, kg, kbt = jax.random.split(key, 5)

    x = jax.random.normal(kx, (N, in_ch, H, W), dtype=jnp.float32)
    # Deterministic synthetic parameters (PyTorch shapes: OIHW weight, (C,) bias,
    # (C,) BN gamma/beta).  Not a checkpoint load.
    weight = jax.random.normal(kw, (out_ch, in_ch, k_size, k_size),
                               dtype=jnp.float32) * 0.1
    bias = jax.random.normal(kb, (out_ch,), dtype=jnp.float32) * 0.1
    gamma = 1.0 + 0.1 * jax.random.normal(kg, (out_ch,), dtype=jnp.float32)
    beta = 0.1 * jax.random.normal(kbt, (out_ch,), dtype=jnp.float32)

    ref = conv_block_reference(x, weight, bias, gamma, beta, pad=pad, dil=dil)

    # block_rows=256 keeps n_tiles=2 at this small test size (n_rows=512) so
    # both v7x TensorCores stay busy; grow it for production problem sizes.

    # Tight correctness check: f32 MXU path.
    fwd_f32 = jax.jit(functools.partial(conv_block_forward, pad=pad, dil=dil,
                                        block_rows=256, mxu_dtype=jnp.float32))
    out_f32 = jax.block_until_ready(fwd_f32(x, weight, bias, gamma, beta))
    np.testing.assert_allclose(np.asarray(out_f32), np.asarray(ref),
                               rtol=1e-4, atol=1e-4)

    # Production path: bf16 MXU inputs (f32 accumulation), looser tolerance.
    fwd_bf16 = jax.jit(functools.partial(conv_block_forward, pad=pad, dil=dil,
                                         block_rows=256, mxu_dtype=jnp.bfloat16))
    out_bf16 = jax.block_until_ready(fwd_bf16(x, weight, bias, gamma, beta))
    np.testing.assert_allclose(np.asarray(out_bf16), np.asarray(ref),
                               rtol=5e-2, atol=5e-2)

    print("KERNEL_OK")
</pallas_src>

<mosaic_0001>
module attributes {stable_mosaic.version = 11 : i64} {
  func.func @stats_kernel(%arg0: i32, %arg1: memref<256x40xf32, #tpu.memory_space<vmem>>, %arg2: memref<40x128xf32, #tpu.memory_space<vmem>>, %arg3: memref<1x2x128xf32, #tpu.memory_space<vmem>>) attributes {dimension_semantics = [#tpu.dimension_semantics<parallel>], iteration_bounds = array<i64: 2>, scalar_prefetch = 0 : i64, scratch_operands = 0 : i64, tpu.core_type = #tpu.core_type<tc>, window_params = [{transform_indices = @transform_0, window_bounds = array<i64: 256, 40>}, {pipeline_mode = #tpu.pipeline_mode<synchronous>, transform_indices = @transform_1, window_bounds = array<i64: 40, 128>}, {transform_indices = @transform_2, window_bounds = array<i64: 1, 2, 128>}]} {
    %c0 = arith.constant 0 : index
    %c0_0 = arith.constant 0 : index
    %0 = vector.load %arg1[%c0, %c0_0] : memref<256x40xf32, #tpu.memory_space<vmem>>, vector<256x40xf32>
    %c0_1 = arith.constant 0 : index
    %c0_2 = arith.constant 0 : index
    %1 = vector.load %arg2[%c0_1, %c0_2] : memref<40x128xf32, #tpu.memory_space<vmem>>, vector<40x128xf32>
    %cst = arith.constant dense<0.000000e+00> : vector<256x128xf32>
    %2 = tpu.matmul %0, %1, %cst {dimension_numbers = #tpu.dot_dimension_numbers<[1], [0], [0], [1], [0, 0, 1, 1], [], []>} : vector<256x40xf32>, vector<40x128xf32>, vector<256x128xf32> -> vector<256x128xf32>
    %cst_3 = arith.constant dense<0.000000e+00> : vector<128xf32>
    %3 = vector.multi_reduction <add>, %2, %cst_3 [0] : vector<256x128xf32> to vector<128xf32>
    %4 = vector.shape_cast %3 : vector<128xf32> to vector<1x128xf32>
    %5 = arith.mulf %2, %2 : vector<256x128xf32>
    %cst_4 = arith.constant dense<0.000000e+00> : vector<128xf32>
    %6 = vector.multi_reduction <add>, %5, %cst_4 [0] : vector<256x128xf32> to vector<128xf32>
    %7 = vector.shape_cast %6 : vector<128xf32> to vector<1x128xf32>
    %8 = tpu.concatenate %4, %7 in 0 : vector<1x128xf32>, vector<1x128xf32> -> vector<2x128xf32>
    %9 = vector.shape_cast %8 : vector<2x128xf32> to vector<1x2x128xf32>
    %c0_5 = arith.constant 0 : index
    %c0_6 = arith.constant 0 : index
    %c0_7 = arith.constant 0 : index
    %10 = vector.load %arg3[%c0_5, %c0_6, %c0_7] : memref<1x2x128xf32, #tpu.memory_space<vmem>>, vector<1x2x128xf32>
    tpu.vector_store %arg3[%c0_5, %c0_6, %c0_7], %9 {strides = array<i32>} : memref<1x2x128xf32, #tpu.memory_space<vmem>>, vector<1x2x128xf32>,
    return
  }
  func.func @transform_0(%arg0: i32) -> (i32, i32) {
    %c0_i32 = arith.constant 0 : i32
    %c0_i32_0 = arith.constant 0 : i32
    return %arg0, %c0_i32 : i32, i32
  }
  func.func @transform_1(%arg0: i32) -> (i32, i32) {
    %c0_i32 = arith.constant 0 : i32
    %c0_i32_0 = arith.constant 0 : i32
    %c0_i32_1 = arith.constant 0 : i32
    return %c0_i32, %c0_i32_0 : i32, i32
  }
  func.func @transform_2(%arg0: i32) -> (i32, i32, i32) {
    %c0_i32 = arith.constant 0 : i32
    %c0_i32_0 = arith.constant 0 : i32
    %c0_i32_1 = arith.constant 0 : i32
    return %arg0, %c0_i32, %c0_i32_0 : i32, i32, i32
  }
}

module attributes {stable_mosaic.version = 11 : i64} {
  func.func @conv_bn_lrelu_kernel(%arg0: i32, %arg1: memref<256x40xf32, #tpu.memory_space<vmem>>, %arg2: memref<40x128xf32, #tpu.memory_space<vmem>>, %arg3: memref<1x128xf32, #tpu.memory_space<vmem>>, %arg4: memref<1x128xf32, #tpu.memory_space<vmem>>, %arg5: memref<256x128xf32, #tpu.memory_space<vmem>>) attributes {dimension_semantics = [#tpu.dimension_semantics<parallel>], iteration_bounds = array<i64: 2>, scalar_prefetch = 0 : i64, scratch_operands = 0 : i64, tpu.core_type = #tpu.core_type<tc>, window_params = [{transform_indices = @transform_0, window_bounds = array<i64: 256, 40>}, {pipeline_mode = #tpu.pipeline_mode<synchronous>, transform_indices = @transform_1, window_bounds = array<i64: 40, 128>}, {pipeline_mode = #tpu.pipeline_mode<synchronous>, transform_indices = @transform_2, window_bounds = array<i64: 1, 128>}, {pipeline_mode = #tpu.pipeline_mode<synchronous>, transform_indices = @transform_3, window_bounds = array<i64: 1, 128>}, {transform_indices = @transform_4, window_bounds = array<i64: 256, 128>}]} {
    %c0 = arith.constant 0 : index
    %c0_0 = arith.constant 0 : index
    %0 = vector.load %arg1[%c0, %c0_0] : memref<256x40xf32, #tpu.memory_space<vmem>>, vector<256x40xf32>
    %c0_1 = arith.constant 0 : index
    %c0_2 = arith.constant 0 : index
    %1 = vector.load %arg2[%c0_1, %c0_2] : memref<40x128xf32, #tpu.memory_space<vmem>>, vector<40x128xf32>
    %cst = arith.constant dense<0.000000e+00> : vector<256x128xf32>
    %2 = tpu.matmul %0, %1, %cst {dimension_numbers = #tpu.dot_dimension_numbers<[1], [0], [0], [1], [0, 0, 1, 1], [], []>} : vector<256x40xf32>, vector<40x128xf32>, vector<256x128xf32> -> vector<256x128xf32>
    %c0_3 = arith.constant 0 : index
    %c0_4 = arith.constant 0 : index
    %3 = vector.load %arg3[%c0_3, %c0_4] : memref<1x128xf32, #tpu.memory_space<vmem>>, vector<1x128xf32>
    %4 = vector.broadcast %3 : vector<1x128xf32> to vector<256x128xf32>
    %5 = arith.mulf %2, %4 : vector<256x128xf32>
    %c0_5 = arith.constant 0 : index
    %c0_6 = arith.constant 0 : index
    %6 = vector.load %arg4[%c0_5, %c0_6] : memref<1x128xf32, #tpu.memory_space<vmem>>, vector<1x128xf32>
    %7 = vector.broadcast %6 : vector<1x128xf32> to vector<256x128xf32>
    %8 = arith.addf %5, %7 : vector<256x128xf32>
    %cst_7 = arith.constant 0.000000e+00 : f32
    %9 = vector.broadcast %cst_7 : f32 to vector<256x128xf32>
    %10 = arith.cmpf oge, %8, %9 : vector<256x128xf32>
    %cst_8 = arith.constant 0.00999999977 : f32
    %11 = vector.broadcast %cst_8 : f32 to vector<256x128xf32>
    %12 = arith.mulf %11, %8 : vector<256x128xf32>
    %13 = arith.select %10, %8, %12 : vector<256x128xi1>, vector<256x128xf32>
    %c0_9 = arith.constant 0 : index
    %c0_10 = arith.constant 0 : index
    %14 = vector.load %arg5[%c0_9, %c0_10] : memref<256x128xf32, #tpu.memory_space<vmem>>, vector<256x128xf32>
    tpu.vector_store %arg5[%c0_9, %c0_10], %13 {strides = array<i32>} : memref<256x128xf32, #tpu.memory_space<vmem>>, vector<256x128xf32>,
    return
  }
  func.func @transform_0(%arg0: i32) -> (i32, i32) {
    %c0_i32 = arith.constant 0 : i32
    %c0_i32_0 = arith.constant 0 : i32
    return %arg0, %c0_i32 : i32, i32
  }
  func.func @transform_1(%arg0: i32) -> (i32, i32) {
    %c0_i32 = arith.constant 0 : i32
    %c0_i32_0 = arith.constant 0 : i32
    %c0_i32_1 = arith.constant 0 : i32
    return %c0_i32, %c0_i32_0 : i32, i32
  }
  func.func @transform_2(%arg0: i32) -> (i32, i32) {
    %c0_i32 = arith.constant 0 : i32
    %c0_i32_0 = arith.constant 0 : i32
    %c0_i32_1 = arith.constant 0 : i32
    return %c0_i32, %c0_i32_0 : i32, i32
  }
  func.func @transform_3(%arg0: i32) -> (i32, i32) {
    %c0_i32 = arith.constant 0 : i32
    %c0_i32_0 = arith.constant 0 : i32
    %c0_i32_1 = arith.constant 0 : i32
    return %c0_i32, %c0_i32_0 : i32, i32
  }
  func.func @transform_4(%arg0: i32) -> (i32, i32) {
    %c0_i32 = arith.constant 0 : i32
    %c0_i32_0 = arith.constant 0 : i32
    return %arg0, %c0_i32 : i32, i32
  }
}

</mosaic_0001>

<llo_original>
// kernel: conv_block_forward.3
$region0: #{conv_block_forward.3}
  #allocation0 [shape = 'u32[]', space=smem, size = 0x4, offset = 0x4, fixed_abs, tag = 'smem constant byte address 0x4 - core index']
  #allocation1 [shape = 'u32[144,128]{1,0:T(1,128)}', space=vmem, size = 0x12000, scoped, tag = 'internal scratch']
  %s0 = inlined_call_operand.vmem [shape: f32[512,40], index: 0, kind: input, shape index: {}]
  %s1 = inlined_call_operand.vmem [shape: f32[40,128], index: 1, kind: input, shape index: {}]
  %s2 = inlined_call_operand.vmem [shape: f32[1,128], index: 2, kind: input, shape index: {}]
  %s3 = inlined_call_operand.vmem [shape: f32[1,128], index: 3, kind: input, shape index: {}]
  %s4 = inlined_call_operand.vmem [shape: f32[512,128], index: 4, kind: output, shape index: {}]
  %s5 = sld [smem:[#allocation0]]
  $region49: #{conv_block_forward.3} parent=0
    _
  %s7 = ssub.s32 1, %s5
  %s8 = scalar_select 0, %s7, %s5
  loop: start=0, step=1, limit=4
  $region2: #{conv_block_forward.3} parent=0 // loop_pre_header
    _
  $region3: #{conv_block_forward.3} parent=0 // loop_header
    %s10 = sphi 0, %s14
    %p11 = scmp.ge.s32.totalorder %s10, 4
    %s20 = sphi 0, %s22
    %s23 = sphi 0, %s20
    %s24 = sphi 0, %s23
    %s40 = sphi 0, %s24
    %s44 = sphi 0, %s44
    %s46 = sphi 0, %s44
    %s47 = sphi 0, %s46
    %s61 = sphi 0, %s47
    %s65 = sphi 0, %s65
    %s67 = sphi 0, %s65
    %s68 = sphi 0, %s67
    %s82 = sphi 0, %s68
    %s86 = sphi 0, %s86
    %s88 = sphi 0, %s86
    %s89 = sphi 0, %s88
    %s103 = sphi 0, %s89
    %s109 = sphi 0, %s111
    %s112 = sphi 0, %s109
    %s113 = sphi 0, %s112
    %s129 = sphi 0, %s113
  $region4: #{conv_block_forward.3} parent=0 // loop_header_branch
    %13 = sbr.rel (%p11) target = $region8
  $region5: #{conv_block_forward.3} parent=0 // loop_body
    %s15 = ssub.s32 %s10, 1
    %s16 = ssub.s32 %s10, 2
    %s17 = sadd.s32 %s10, 1
    %s18 = ssub.s32 %s10, %s17
    %p19 = scmp.eq.s32.totalorder %s18, 0
    %s21 = sadd.s32 %s20, 1
    %s22 = scalar_select %p19, %s20, %s21
    %p25 = pneg %p19
    %p26 = scmp.eq.s32.totalorder %s10, 1
    %p27 = por %p25, %p26
    %p28 = scmp.ne.s32.totalorder %s20, %s23
    %p29 = scmp.eq.s32.totalorder %s10, 0
    %p30 = por %p28, %p29
    %p31 = scmp.ne.s32.totalorder %s20, %s23
    %p32 = scmp.eq.s32.totalorder %s15, 1
    %p33 = por %p31, %p32
    %p34 = scmp.ne.s32.totalorder %s23, %s24
    %p35 = scmp.eq.s32.totalorder %s15, 0
    %p36 = por %p34, %p35
    %p37 = scmp.ne.s32.totalorder %s23, %s24
    %p38 = scmp.eq.s32.totalorder %s16, 1
    %p39 = por %p37, %p38
    %p41 = scmp.ne.s32.totalorder %s24, %s40
    %p42 = scmp.eq.s32.totalorder %s16, 0
    %p43 = por %p41, %p42
    %s45 = sadd.s32 %s44, 1
    %p48 = scmp.eq.s32.totalorder %s10, 1
    %p49 = scmp.ne.s32.totalorder %s44, %s46
    %p50 = scmp.eq.s32.totalorder %s10, 0
    %p51 = por %p49, %p50
    %p52 = scmp.ne.s32.totalorder %s44, %s46
    %p53 = scmp.eq.s32.totalorder %s15, 1
    %p54 = por %p52, %p53
    %p55 = scmp.ne.s32.totalorder %s46, %s47
    %p56 = scmp.eq.s32.totalorder %s15, 0
    %p57 = por %p55, %p56
    %p58 = scmp.ne.s32.totalorder %s46, %s47
    %p59 = scmp.eq.s32.totalorder %s16, 1
    %p60 = por %p58, %p59
    %p62 = scmp.ne.s32.totalorder %s47, %s61
    %p63 = scmp.eq.s32.totalorder %s16, 0
    %p64 = por %p62, %p63
    %s66 = sadd.s32 %s65, 1
    %p69 = scmp.eq.s32.totalorder %s10, 1
    %p70 = scmp.ne.s32.totalorder %s65, %s67
    %p71 = scmp.eq.s32.totalorder %s10, 0
    %p72 = por %p70, %p71
    %p73 = scmp.ne.s32.totalorder %s65, %s67
    %p74 = scmp.eq.s32.totalorder %s15, 1
    %p75 = por %p73, %p74
    %p76 = scmp.ne.s32.totalorder %s67, %s68
    %p77 = scmp.eq.s32.totalorder %s15, 0
    %p78 = por %p76, %p77
    %p79 = scmp.ne.s32.totalorder %s67, %s68
    %p80 = scmp.eq.s32.totalorder %s16, 1
    %p81 = por %p79, %p80
    %p83 = scmp.ne.s32.totalorder %s68, %s82
    %p84 = scmp.eq.s32.totalorder %s16, 0
    %p85 = por %p83, %p84
    %s87 = sadd.s32 %s86, 1
    %p90 = scmp.eq.s32.totalorder %s10, 1
    %p91 = scmp.ne.s32.totalorder %s86, %s88
    %p92 = scmp.eq.s32.totalorder %s10, 0
    %p93 = por %p91, %p92
    %p94 = scmp.ne.s32.totalorder %s86, %s88
    %p95 = scmp.eq.s32.totalorder %s15, 1
    %p96 = por %p94, %p95
    %p97 = scmp.ne.s32.totalorder %s88, %s89
    %p98 = scmp.eq.s32.totalorder %s15, 0
    %p99 = por %p97, %p98
    %p100 = scmp.ne.s32.totalorder %s88, %s89
    %p101 = scmp.eq.s32.totalorder %s16, 1
    %p102 = por %p100, %p101
    %p104 = scmp.ne.s32.totalorder %s89, %s103
    %p105 = scmp.eq.s32.totalorder %s16, 0
    %p106 = por %p104, %p105
    %s107 = ssub.s32 %s10, %s17
    %p108 = scmp.eq.s32.totalorder %s107, 0
    %s110 = sadd.s32 %s109, 1
    %s111 = scalar_select %p108, %s109, %s110
    %p114 = pneg %p108
    %p115 = scmp.eq.s32.totalorder %s10, 1
    %p116 = por %p114, %p115
    %p117 = scmp.ne.s32.totalorder %s109, %s112
    %p118 = scmp.eq.s32.totalorder %s10, 0
    %p119 = por %p117, %p118
    %p120 = scmp.ne.s32.totalorder %s109, %s112
    %p121 = scmp.eq.s32.totalorder %s15, 1
    %p122 = por %p120, %p121
    %p123 = scmp.ne.s32.totalorder %s112, %s113
    %p124 = scmp.eq.s32.totalorder %s15, 0
    %p125 = por %p123, %p124
    %p126 = scmp.ne.s32.totalorder %s112, %s113
    %p127 = scmp.eq.s32.totalorder %s16, 1
    %p128 = por %p126, %p127
    %p130 = scmp.ne.s32.totalorder %s113, %s129
    %p131 = scmp.eq.s32.totalorder %s16, 0
    %p132 = por %p130, %p131
    %p133 = scmp.le.s32.totalorder 1, %s10
    %p134 = scmp.lt.s32.totalorder %s10, 3
    %p135 = pnand %p133, %p134
    %p136 = pneg %p135
    // Predicated region
    $region9: #{conv_block_forward.3} parent=5 // pred_check
      _
    $region10: #{conv_block_forward.3} parent=5 // pred_check_branch
      %138 = sbr.rel (%p135) target = $region12
    $region11: #{conv_block_forward.3} parent=5 // pred_region
      %s139 = ssub.s32 %s10, 1
      // Predicated region
      $region13: #{conv_block_forward.3} parent=11 // pred_check
        %p140 = pneg %p57
      $region14: #{conv_block_forward.3} parent=11 // pred_check_branch
        %142 = sbr.rel (%p140) target = $region16
      $region15: #{conv_block_forward.3} parent=11 // pred_region
        _
      $region16: #{conv_block_forward.3} parent=11 // pred_fallthru
        _
      // Predicated region
      $region17: #{conv_block_forward.3} parent=11 // pred_check
        %p143 = pneg %p78
      $region18: #{conv_block_forward.3} parent=11 // pred_check_branch
        %145 = sbr.rel (%p143) target = $region20
      $region19: #{conv_block_forward.3} parent=11 // pred_region
        _
      $region20: #{conv_block_forward.3} parent=11 // pred_fallthru
        _
      // Predicated region
      $region21: #{conv_block_forward.3} parent=11 // pred_check
        %p146 = pneg %p99
      $region22: #{conv_block_forward.3} parent=11 // pred_check_branch
        %148 = sbr.rel (%p146) target = $region24
      $region23: #{conv_block_forward.3} parent=11 // pred_region
        _
      $region24: #{conv_block_forward.3} parent=11 // pred_fallthru
        _
    $region12: #{conv_block_forward.3} parent=5 // pred_fallthru
      _
    %p149 = scmp.lt.s32.totalorder %s10, 2
    // Predicated region
    $region25: #{conv_block_forward.3} parent=5 // pred_check
      %p150 = pneg %p149
    $region26: #{conv_block_forward.3} parent=5 // pred_check_branch
      %152 = sbr.rel (%p150) target = $region28
    $region27: #{conv_block_forward.3} parent=5 // pred_region
      // Predicated region
      $region29: #{conv_block_forward.3} parent=27 // pred_check
        %p153 = pneg %p30
      $region30: #{conv_block_forward.3} parent=27 // pred_check_branch
        %155 = sbr.rel (%p153) target = $region32
      $region31: #{conv_block_forward.3} parent=27 // pred_region
        %s156 = smul.u32 32, %s10
        %p157 = scmp.lt.s32.totalorder %s156, 63
        %s158 = scalar_select %p157, %s156, 63
        %s159 = smul.addr %s158, 8
        %s160 = scalar_lea.vmem %s0, %s159
        %s161 = smul.u32 32, %s10
      $region32: #{conv_block_forward.3} parent=27 // pred_fallthru
        _
    $region28: #{conv_block_forward.3} parent=5 // pred_fallthru
      _
    %p162 = scmp.le.s32.totalorder 1, %s10
    %p163 = scmp.lt.s32.totalorder %s10, 3
    %p164 = pnand %p162, %p163
    %p165 = pneg %p164
    // Predicated region
    $region33: #{conv_block_forward.3} parent=5 // pred_check
      _
    $region34: #{conv_block_forward.3} parent=5 // pred_check_branch
      %167 = sbr.rel (%p164) target = $region36
    $region35: #{conv_block_forward.3} parent=5 // pred_region
      %s168 = ssub.s32 %s10, 1
      %s169 = smul.u32 32, %s15
      %p170 = scmp.lt.s32.totalorder %s169, 63
      %s171 = scalar_select %p170, %s169, 63
      %s172 = smul.addr %s171, 8
      %s173 = scalar_lea.vmem %s0, %s172
      %p174 = pneg %p36
      %p175 = pneg %p33
      %p176 = pneg %p57
      %p177 = pneg %p54
      %p178 = pneg %p78
      %p179 = pneg %p75
      %p180 = pneg %p99
      %p181 = pneg %p96
      %p182 = pneg %p125
      %p183 = pneg %p122
      %s184 = smul.u32 32, %s15
      %p185 = scmp.lt.s32.totalorder %s184, 63
      %s186 = scalar_select %p185, %s184, 63
      %s187 = smul.addr %s186, 8
      %s188 = scalar_lea.vmem %s4, %s187
      %s189 = smul.u32 32, %s15
      %p190 = scmp.lt.s32.totalorder %s189, 63
      %s191 = scalar_select %p190, %s189, 63
      %s192 = smul.addr %s191, 8
      %s193 = scalar_lea.vmem %s0, %s192
      %s194 = smul.u32 32, %s15
      %s195 = smul.u32 32, %s15
      %p196 = scmp.lt.s32.totalorder %s195, 63
      %s197 = scalar_select %p196, %s195, 63
      %s198 = smul.addr %s197, 8
      %s199 = scalar_lea.vmem %s4, %s198
      %s200 = smul.u32 32, %s15
      %v201 = vld [vmem:[%s193] sm:$0xff]
      %v202 = vld [vmem:[%s193 + $0x8] sm:$0xff]
      %v203 = vld [vmem:[%s193 + $0x10] sm:$0xff]
      %v204 = vld [vmem:[%s193 + $0x18] sm:$0xff]
      %v205 = vld [vmem:[%s193 + $0x20] sm:$0xff]
      %v206 = vld [vmem:[%s193 + $0x28] sm:$0xff]
      %v207 = vld [vmem:[%s193 + $0x30] sm:$0xff]
      %v208 = vld [vmem:[%s193 + $0x38] sm:$0xff]
      %v209 = vld [vmem:[%s193 + $0x40] sm:$0xff]
      %v210 = vld [vmem:[%s193 + $0x48] sm:$0xff]
      %v211 = vld [vmem:[%s193 + $0x50] sm:$0xff]
      %v212 = vld [vmem:[%s193 + $0x58] sm:$0xff]
      %v213 = vld [vmem:[%s193 + $0x60] sm:$0xff]
      %v214 = vld [vmem:[%s193 + $0x68] sm:$0xff]
      %v215 = vld [vmem:[%s193 + $0x70] sm:$0xff]
      %v216 = vld [vmem:[%s193 + $0x78] sm:$0xff]
      %v217 = vld [vmem:[%s193 + $0x80] sm:$0xff]
      %v218 = vld [vmem:[%s193 + $0x88] sm:$0xff]
      %v219 = vld [vmem:[%s193 + $0x90] sm:$0xff]
      %v220 = vld [vmem:[%s193 + $0x98] sm:$0xff]
      %v221 = vld [vmem:[%s193 + $0xa0] sm:$0xff]
      %v222 = vld [vmem:[%s193 + $0xa8] sm:$0xff]
      %v223 = vld [vmem:[%s193 + $0xb0] sm:$0xff]
      %v224 = vld [vmem:[%s193 + $0xb8] sm:$0xff]
      %v225 = vld [vmem:[%s193 + $0xc0] sm:$0xff]
      %v226 = vld [vmem:[%s193 + $0xc8] sm:$0xff]
      %v227 = vld [vmem:[%s193 + $0xd0] sm:$0xff]
      %v228 = vld [vmem:[%s193 + $0xd8] sm:$0xff]
      %v229 = vld [vmem:[%s193 + $0xe0] sm:$0xff]
      %v230 = vld [vmem:[%s193 + $0xe8] sm:$0xff]
      %v231 = vld [vmem:[%s193 + $0xf0] sm:$0xff]
      %v232 = vld [vmem:[%s193 + $0xf8] sm:$0xff]
      %v233 = vld [vmem:[%s1] sm:$0xff]
      %v234 = vld [vmem:[%s1 + $0x8] sm:$0xff]
      %v235 = vld [vmem:[%s1 + $0x10] sm:$0xff]
      %v236 = vld [vmem:[%s1 + $0x18] sm:$0xff]
      %v237 = vld [vmem:[%s1 + $0x20] sm:$0xff]
      %vm238 = vcmask 326656
      %v240 = vsel %vm238, %v201, 0
      %v243 = vsel %vm238, %v202, 0
      %v246 = vsel %vm238, %v203, 0
      %v249 = vsel %vm238, %v204, 0
      %v252 = vsel %vm238, %v205, 0
      %v255 = vsel %vm238, %v206, 0
      %v258 = vsel %vm238, %v207, 0
      %v261 = vsel %vm238, %v208, 0
      %v264 = vsel %vm238, %v209, 0
      %v267 = vsel %vm238, %v210, 0
      %v270 = vsel %vm238, %v211, 0
      %v273 = vsel %vm238, %v212, 0
      %v276 = vsel %vm238, %v213, 0
      %v279 = vsel %vm238, %v214, 0
      %v282 = vsel %vm238, %v215, 0
      %v285 = vsel %vm238, %v216, 0
      %v288 = vsel %vm238, %v217, 0
      %v291 = vsel %vm238, %v218, 0
      %v294 = vsel %vm238, %v219, 0
      %v297 = vsel %vm238, %v220, 0
      %v300 = vsel %vm238, %v221, 0
      %v303 = vsel %vm238, %v222, 0
      %v306 = vsel %vm238, %v223, 0
      %v309 = vsel %vm238, %v224, 0
      %v312 = vsel %vm238, %v225, 0
      %v315 = vsel %vm238, %v226, 0
      %v318 = vsel %vm238, %v227, 0
      %v321 = vsel %vm238, %v228, 0
      %v324 = vsel %vm238, %v229, 0
      %v327 = vsel %vm238, %v230, 0
      %v330 = vsel %vm238, %v231, 0
      %v333 = vsel %vm238, %v232, 0
      %335 = vmatprep.subr.mxu0 0.0
      %336 = vmatpush1.msra.mxu0 %v233
      %337 = vmatprep.subr.mxu0 0.0
      %338 = vmatpush1.msra.mxu0 %v234
      %339 = vmatprep.subr.mxu0 0.0
      %340 = vmatpush1.msra.mxu0 %v235
      %341 = vmatprep.subr.mxu0 0.0
      %342 = vmatpush1.msra.mxu0 %v236
      %343 = vmatprep.subr.mxu0 0.0
      %344 = vmatpush1.msra.mxu0 %v237
      %345 = vmatprep.subr.mxu0 0.0
      %346 = vmatpush1.msra.mxu0 0.0
      %347 = vmatprep.subr.mxu0 0.0
      %348 = vmatpush1.msra.mxu0 0.0
      %349 = vmatprep.subr.mxu0 0.0
      %350 = vmatpush1.msra.mxu0 0.0
      %351 = vmatprep.subr.mxu0 0.0
      %352 = vmatpush1.msra.mxu0 0.0
      %353 = vmatprep.subr.mxu0 0.0
      %354 = vmatpush1.msra.mxu0 0.0
      %355 = vmatprep.subr.mxu0 0.0
      %356 = vmatpush1.msra.mxu0 0.0
      %357 = vmatprep.subr.mxu0 0.0
      %358 = vmatpush1.msra.mxu0 0.0
      %359 = vmatprep.subr.mxu0 0.0
      %360 = vmatpush1.msra.mxu0 0.0
      %361 = vmatprep.subr.mxu0 0.0
      %362 = vmatpush1.msra.mxu0 0.0
      %363 = vmatprep.subr.mxu0 0.0
      %364 = vmatpush1.msra.mxu0 0.0
      %365 = vmatprep.subr.mxu0 0.0
      %366 = vmatpush1.msra.mxu0 0.0
      %367 = vmatprep.subr.mxu0 0.0
      %368 = vmatpush1.msra.mxu0 0.0
      %369 = vmatprep.subr.mxu0 0.0
      %370 = vmatpush1.msra.mxu0 0.0
      %371 = vmatprep.subr.mxu0 0.0
      %372 = vmatpush1.msra.mxu0 0.0
      %373 = vmatprep.subr.mxu0 0.0
      %374 = vmatpush1.msra.mxu0 0.0
      %375 = vmatprep.subr.mxu0 0.0
      %376 = vmatpush1.msra.mxu0 0.0
      %377 = vmatprep.subr.mxu0 0.0
      %378 = vmatpush1.msra.mxu0 0.0
      %379 = vmatprep.subr.mxu0 0.0
      %380 = vmatpush1.msra.mxu0 0.0
      %381 = vmatprep.subr.mxu0 0.0
      %382 = vmatpush1.msra.mxu0 0.0
      %383 = vmatprep.subr.mxu0 0.0
      %384 = vmatpush1.msra.mxu0 0.0
      %385 = vmatprep.subr.mxu0 0.0
      %386 = vmatpush1.msra.mxu0 0.0
      %387 = vmatprep.subr.mxu0 0.0
      %388 = vmatpush1.msra.mxu0 0.0
      %389 = vmatprep.subr.mxu0 0.0
      %390 = vmatpush1.msra.mxu0 0.0
      %391 = vmatprep.subr.mxu0 0.0
      %392 = vmatpush1.msra.mxu0 0.0
      %393 = vmatprep.subr.mxu0 0.0
      %394 = vmatpush1.msra.mxu0 0.0
      %395 = vmatprep.subr.mxu0 0.0
      %396 = vmatpush1.msra.mxu0 0.0
      %397 = vmatprep.subr.mxu0 0.0
      %398 = vmatpush1.msra.mxu0 0.0
      %399 = vmatprep.mubr.f32.mxu0 0.0
      %400 = vmatmul.mubr.f32.gmra.mrb[0].mxu0 %v240
      %v401 = vpop.f32.mrb[0].mxu0
      %v402 = vadd.f32 0.0, %v401
      %v403 = vpop.f32.mrb[0].mxu0
      %404 = vmatprep.mubr.f32.mxu0 0.0
      %405 = vmatmul.mubr.f32.gmra.mrb[0].mxu0 %v243
      %v406 = vpop.f32.mrb[0].mxu0
      %v407 = vadd.f32 0.0, %v406
      %v408 = vpop.f32.mrb[0].mxu0
      %409 = vmatprep.mubr.f32.mxu0 0.0
      %410 = vmatmul.mubr.f32.gmra.mrb[0].mxu0 %v246
      %v411 = vpop.f32.mrb[0].mxu0
      %v412 = vadd.f32 0.0, %v411
      %v413 = vpop.f32.mrb[0].mxu0
      %414 = vmatprep.mubr.f32.mxu0 0.0
      %415 = vmatmul.mubr.f32.gmra.mrb[0].mxu0 %v249
      %v416 = vpop.f32.mrb[0].mxu0
      %v417 = vadd.f32 0.0, %v416
      %v418 = vpop.f32.mrb[0].mxu0
      %419 = vmatprep.mubr.f32.mxu0 0.0
      %420 = vmatmul.mubr.f32.gmra.mrb[0].mxu0 %v252
      %v421 = vpop.f32.mrb[0].mxu0
      %v422 = vadd.f32 0.0, %v421
      %v423 = vpop.f32.mrb[0].mxu0
      %424 = vmatprep.mubr.f32.mxu0 0.0
      %425 = vmatmul.mubr.f32.gmra.mrb[0].mxu0 %v255
      %v426 = vpop.f32.mrb[0].mxu0
      %v427 = vadd.f32 0.0, %v426
      %v428 = vpop.f32.mrb[0].mxu0
      %429 = vmatprep.mubr.f32.mxu0 0.0
      %430 = vmatmul.mubr.f32.gmra.mrb[0].mxu0 %v258
      %v431 = vpop.f32.mrb[0].mxu0
      %v432 = vadd.f32 0.0, %v431
      %v433 = vpop.f32.mrb[0].mxu0
      %434 = vmatprep.mubr.f32.mxu0 0.0
      %435 = vmatmul.mubr.f32.gmra.mrb[0].mxu0 %v261
      %v436 = vpop.f32.mrb[0].mxu0
      %v437 = vadd.f32 0.0, %v436
      %v438 = vpop.f32.mrb[0].mxu0
      %439 = vmatprep.mubr.f32.mxu0 0.0
      %440 = vmatmul.mubr.f32.gmra.mrb[0].mxu0 %v264
      %v441 = vpop.f32.mrb[0].mxu0
      %v442 = vadd.f32 0.0, %v441
      %v443 = vpop.f32.mrb[0].mxu0
      %444 = vmatprep.mubr.f32.mxu0 0.0
      %445 = vmatmul.mubr.f32.gmra.mrb[0].mxu0 %v267
      %v446 = vpop.f32.mrb[0].mxu0
      %v447 = vadd.f32 0.0, %v446
      %v448 = vpop.f32.mrb[0].mxu0
      %449 = vmatprep.mubr.f32.mxu0 0.0
      %450 = vmatmul.mubr.f32.gmra.mrb[0].mxu0 %v270
      %v451 = vpop.f32.mrb[0].mxu0
      %v452 = vadd.f32 0.0, %v451
      %v453 = vpop.f32.mrb[0].mxu0
      %454 = vmatprep.mubr.f32.mxu0 0.0
      %455 = vmatmul.mubr.f32.gmra.mrb[0].mxu0 %v273
      %v456 = vpop.f32.mrb[0].mxu0
      %v457 = vadd.f32 0.0, %v456
      %v458 = vpop.f32.mrb[0].mxu0
      %459 = vmatprep.mubr.f32.mxu0 0.0
      %460 = vmatmul.mubr.f32.gmra.mrb[0].mxu0 %v276
      %v461 = vpop.f32.mrb[0].mxu0
      %v462 = vadd.f32 0.0, %v461
      %v463 = vpop.f32.mrb[0].mxu0
      %464 = vmatprep.mubr.f32.mxu0 0.0
      %465 = vmatmul.mubr.f32.gmra.mrb[0].mxu0 %v279
      %v466 = vpop.f32.mrb[0].mxu0
      %v467 = vadd.f32 0.0, %v466
      %v468 = vpop.f32.mrb[0].mxu0
      %469 = vmatprep.mubr.f32.mxu0 0.0
      %470 = vmatmul.mubr.f32.gmra.mrb[0].mxu0 %v282
      %v471 = vpop.f32.mrb[0].mxu0
      %v472 = vadd.f32 0.0, %v471
      %v473 = vpop.f32.mrb[0].mxu0
      %474 = vmatprep.mubr.f32.mxu0 0.0
      %475 = vmatmul.mubr.f32.gmra.mrb[0].mxu0 %v285
      %v476 = vpop.f32.mrb[0].mxu0
      %v477 = vadd.f32 0.0, %v476
      %v478 = vpop.f32.mrb[0].mxu0
      %479 = vmatprep.mubr.f32.mxu0 0.0
      %480 = vmatmul.mubr.f32.gmra.mrb[0].mxu0 %v288
      %v481 = vpop.f32.mrb[0].mxu0
      %v482 = vadd.f32 0.0, %v481
      %v483 = vpop.f32.mrb[0].mxu0
      %484 = vmatprep.mubr.f32.mxu0 0.0
      %485 = vmatmul.mubr.f32.gmra.mrb[0].mxu0 %v291
      %v486 = vpop.f32.mrb[0].mxu0
      %v487 = vadd.f32 0.0, %v486
      %v488 = vpop.f32.mrb[0].mxu0
      %489 = vmatprep.mubr.f32.mxu0 0.0
      %490 = vmatmul.mubr.f32.gmra.mrb[0].mxu0 %v294
      %v491 = vpop.f32.mrb[0].mxu0
      %v492 = vadd.f32 0.0, %v491
      %v493 = vpop.f32.mrb[0].mxu0
      %494 = vmatprep.mubr.f32.mxu0 0.0
      %495 = vmatmul.mubr.f32.gmra.mrb[0].mxu0 %v297
      %v496 = vpop.f32.mrb[0].mxu0
      %v497 = vadd.f32 0.0, %v496
      %v498 = vpop.f32.mrb[0].mxu0
      %499 = vmatprep.mubr.f32.mxu0 0.0
      %500 = vmatmul.mubr.f32.gmra.mrb[0].mxu0 %v300
      %v501 = vpop.f32.mrb[0].mxu0
      %v502 = vadd.f32 0.0, %v501
      %v503 = vpop.f32.mrb[0].mxu0
      %504 = vmatprep.mubr.f32.mxu0 0.0
      %505 = vmatmul.mubr.f32.gmra.mrb[0].mxu0 %v303
      %v506 = vpop.f32.mrb[0].mxu0
      %v507 = vadd.f32 0.0, %v506
      %v508 = vpop.f32.mrb[0].mxu0
      %509 = vmatprep.mubr.f32.mxu0 0.0
      %510 = vmatmul.mubr.f32.gmra.mrb[0].mxu0 %v306
      %v511 = vpop.f32.mrb[0].mxu0
      %v512 = vadd.f32 0.0, %v511
      %v513 = vpop.f32.mrb[0].mxu0
      %514 = vmatprep.mubr.f32.mxu0 0.0
      %515 = vmatmul.mubr.f32.gmra.mrb[0].mxu0 %v309
      %v516 = vpop.f32.mrb[0].mxu0
      %v517 = vadd.f32 0.0, %v516
      %v518 = vpop.f32.mrb[0].mxu0
      %519 = vmatprep.mubr.f32.mxu0 0.0
      %520 = vmatmul.mubr.f32.gmra.mrb[0].mxu0 %v312
      %v521 = vpop.f32.mrb[0].mxu0
      %v522 = vadd.f32 0.0, %v521
      %v523 = vpop.f32.mrb[0].mxu0
      %524 = vmatprep.mubr.f32.mxu0 0.0
      %525 = vmatmul.mubr.f32.gmra.mrb[0].mxu0 %v315
      %v526 = vpop.f32.mrb[0].mxu0
      %v527 = vadd.f32 0.0, %v526
      %v528 = vpop.f32.mrb[0].mxu0
      %529 = vmatprep.mubr.f32.mxu0 0.0
      %530 = vmatmul.mubr.f32.gmra.mrb[0].mxu0 %v318
      %v531 = vpop.f32.mrb[0].mxu0
      %v532 = vadd.f32 0.0, %v531
      %v533 = vpop.f32.mrb[0].mxu0
      %534 = vmatprep.mubr.f32.mxu0 0.0
      %535 = vmatmul.mubr.f32.gmra.mrb[0].mxu0 %v321
      %v536 = vpop.f32.mrb[0].mxu0
      %v537 = vadd.f32 0.0, %v536
      %v538 = vpop.f32.mrb[0].mxu0
      %539 = vmatprep.mubr.f32.mxu0 0.0
      %540 = vmatmul.mubr.f32.gmra.mrb[0].mxu0 %v324
      %v541 = vpop.f32.mrb[0].mxu0
      %v542 = vadd.f32 0.0, %v541
      %v543 = vpop.f32.mrb[0].mxu0
      %544 = vmatprep.mubr.f32.mxu0 0.0
      %545 = vmatmul.mubr.f32.gmra.mrb[0].mxu0 %v327
      %v546 = vpop.f32.mrb[0].mxu0
      %v547 = vadd.f32 0.0, %v546
      %v548 = vpop.f32.mrb[0].mxu0
      %549 = vmatprep.mubr.f32.mxu0 0.0
      %550 = vmatmul.mubr.f32.gmra.mrb[0].mxu0 %v330
      %v551 = vpop.f32.mrb[0].mxu0
      %v552 = vadd.f32 0.0, %v551
      %v553 = vpop.f32.mrb[0].mxu0
      %554 = vmatprep.mubr.f32.mxu0 0.0
      %555 = vmatmul.mubr.f32.gmra.mrb[0].mxu0 %v333
      %v556 = vpop.f32.mrb[0].mxu0
      %v557 = vadd.f32 0.0, %v556
      %v558 = vpop.f32.mrb[0].mxu0
      %559 = vdwg.mxu0
      %v560 = vld [vmem:[%s2] sm:$0x1]
      %v562 = vlaneseq
      %v563 = vshrl.u32 %v562, 7
      %v564 = vsub.s32 0, %v563
      %v565 = vrot.slane %v560, %v564
      %v567 = vmul.f32 %v402, %v565
      %v568 = vmul.f32 %v407, %v565
      %v569 = vmul.f32 %v412, %v565
      %v570 = vmul.f32 %v417, %v565
      %v571 = vmul.f32 %v422, %v565
      %v572 = vmul.f32 %v427, %v565
      %v573 = vmul.f32 %v432, %v565
      %v574 = vmul.f32 %v437, %v565
      %v575 = vmul.f32 %v442, %v565
      %v576 = vmul.f32 %v447, %v565
      %v577 = vmul.f32 %v452, %v565
      %v578 = vmul.f32 %v457, %v565
      %v579 = vmul.f32 %v462, %v565
      %v580 = vmul.f32 %v467, %v565
      %v581 = vmul.f32 %v472, %v565
      %v582 = vmul.f32 %v477, %v565
      %v583 = vmul.f32 %v482, %v565
      %v584 = vmul.f32 %v487, %v565
      %v585 = vmul.f32 %v492, %v565
      %v586 = vmul.f32 %v497, %v565
      %v587 = vmul.f32 %v502, %v565
      %v588 = vmul.f32 %v507, %v565
      %v589 = vmul.f32 %v512, %v565
      %v590 = vmul.f32 %v517, %v565
      %v591 = vmul.f32 %v522, %v565
      %v592 = vmul.f32 %v527, %v565
      %v593 = vmul.f32 %v532, %v565
      %v594 = vmul.f32 %v537, %v565
      %v595 = vmul.f32 %v542, %v565
      %v596 = vmul.f32 %v547, %v565
      %v597 = vmul.f32 %v552, %v565
      %v598 = vmul.f32 %v557, %v565
      %v599 = vld [vmem:[%s3] sm:$0x1]
      %v601 = vlaneseq
      %v602 = vshrl.u32 %v601, 7
      %v603 = vsub.s32 0, %v602
      %v604 = vrot.slane %v599, %v603
      %v606 = vadd.f32 %v567, %v604
      %v607 = vadd.f32 %v568, %v604
      %v608 = vadd.f32 %v569, %v604
      %v609 = vadd.f32 %v570, %v604
      %v610 = vadd.f32 %v571, %v604
      %v611 = vadd.f32 %v572, %v604
      %v612 = vadd.f32 %v573, %v604
      %v613 = vadd.f32 %v574, %v604
      %v614 = vadd.f32 %v575, %v604
      %v615 = vadd.f32 %v576, %v604
      %v616 = vadd.f32 %v577, %v604
      %v617 = vadd.f32 %v578, %v604
      %v618 = vadd.f32 %v579, %v604
      %v619 = vadd.f32 %v580, %v604
      %v620 = vadd.f32 %v581, %v604
      %v621 = vadd.f32 %v582, %v604
      %v622 = vadd.f32 %v583, %v604
      %v623 = vadd.f32 %v584, %v604
      %v624 = vadd.f32 %v585, %v604
      %v625 = vadd.f32 %v586, %v604
      %v626 = vadd.f32 %v587, %v604
      %v627 = vadd.f32 %v588, %v604
      %v628 = vadd.f32 %v589, %v604
      %v629 = vadd.f32 %v590, %v604
      %v630 = vadd.f32 %v591, %v604
      %v631 = vadd.f32 %v592, %v604
      %v632 = vadd.f32 %v593, %v604
      %v633 = vadd.f32 %v594, %v604
      %v634 = vadd.f32 %v595, %v604
      %v635 = vadd.f32 %v596, %v604
      %v636 = vadd.f32 %v597, %v604
      %v637 = vadd.f32 %v598, %v604
      %vm638 = vcmp.ge.f32.partialorder %v606, 0.0
      %vm639 = vcmp.ge.f32.partialorder %v607, 0.0
      %vm640 = vcmp.ge.f32.partialorder %v608, 0.0
      %vm641 = vcmp.ge.f32.partialorder %v609, 0.0
      %vm642 = vcmp.ge.f32.partialorder %v610, 0.0
      %vm643 = vcmp.ge.f32.partialorder %v611, 0.0
      %vm644 = vcmp.ge.f32.partialorder %v612, 0.0
      %vm645 = vcmp.ge.f32.partialorder %v613, 0.0
      %vm646 = vcmp.ge.f32.partialorder %v614, 0.0
      %vm647 = vcmp.ge.f32.partialorder %v615, 0.0
      %vm648 = vcmp.ge.f32.partialorder %v616, 0.0
      %vm649 = vcmp.ge.f32.partialorder %v617, 0.0
      %vm650 = vcmp.ge.f32.partialorder %v618, 0.0
      %vm651 = vcmp.ge.f32.partialorder %v619, 0.0
      %vm652 = vcmp.ge.f32.partialorder %v620, 0.0
      %vm653 = vcmp.ge.f32.partialorder %v621, 0.0
      %vm654 = vcmp.ge.f32.partialorder %v622, 0.0
      %vm655 = vcmp.ge.f32.partialorder %v623, 0.0
      %vm656 = vcmp.ge.f32.partialorder %v624, 0.0
      %vm657 = vcmp.ge.f32.partialorder %v625, 0.0
      %vm658 = vcmp.ge.f32.partialorder %v626, 0.0
      %vm659 = vcmp.ge.f32.partialorder %v627, 0.0
      %vm660 = vcmp.ge.f32.partialorder %v628, 0.0
      %vm661 = vcmp.ge.f32.partialorder %v629, 0.0
      %vm662 = vcmp.ge.f32.partialorder %v630, 0.0
      %vm663 = vcmp.ge.f32.partialorder %v631, 0.0
      %vm664 = vcmp.ge.f32.partialorder %v632, 0.0
      %vm665 = vcmp.ge.f32.partialorder %v633, 0.0
      %vm666 = vcmp.ge.f32.partialorder %v634, 0.0
      %vm667 = vcmp.ge.f32.partialorder %v635, 0.0
      %vm668 = vcmp.ge.f32.partialorder %v636, 0.0
      %vm669 = vcmp.ge.f32.partialorder %v637, 0.0
      %v670 = vmul.f32 %v606, 0.01
      %v671 = vmul.f32 %v607, 0.01
      %v672 = vmul.f32 %v608, 0.01
      %v673 = vmul.f32 %v609, 0.01
      %v674 = vmul.f32 %v610, 0.01
      %v675 = vmul.f32 %v611, 0.01
      %v676 = vmul.f32 %v612, 0.01
      %v677 = vmul.f32 %v613, 0.01
      %v678 = vmul.f32 %v614, 0.01
      %v679 = vmul.f32 %v615, 0.01
      %v680 = vmul.f32 %v616, 0.01
      %v681 = vmul.f32 %v617, 0.01
      %v682 = vmul.f32 %v618, 0.01
      %v683 = vmul.f32 %v619, 0.01
      %v684 = vmul.f32 %v620, 0.01
      %v685 = vmul.f32 %v621, 0.01
      %v686 = vmul.f32 %v622, 0.01
      %v687 = vmul.f32 %v623, 0.01
      %v688 = vmul.f32 %v624, 0.01
      %v689 = vmul.f32 %v625, 0.01
      %v690 = vmul.f32 %v626, 0.01
      %v691 = vmul.f32 %v627, 0.01
      %v692 = vmul.f32 %v628, 0.01
      %v693 = vmul.f32 %v629, 0.01
      %v694 = vmul.f32 %v630, 0.01
      %v695 = vmul.f32 %v631, 0.01
      %v696 = vmul.f32 %v632, 0.01
      %v697 = vmul.f32 %v633, 0.01
      %v698 = vmul.f32 %v634, 0.01
      %v699 = vmul.f32 %v635, 0.01
      %v700 = vmul.f32 %v636, 0.01
      %v701 = vmul.f32 %v637, 0.01
      %v702 = vsel %vm638, %v606, %v670
      %v703 = vsel %vm639, %v607, %v671
      %v704 = vsel %vm640, %v608, %v672
      %v705 = vsel %vm641, %v609, %v673
      %v706 = vsel %vm642, %v610, %v674
      %v707 = vsel %vm643, %v611, %v675
      %v708 = vsel %vm644, %v612, %v676
      %v709 = vsel %vm645, %v613, %v677
      %v710 = vsel %vm646, %v614, %v678
      %v711 = vsel %vm647, %v615, %v679
      %v712 = vsel %vm648, %v616, %v680
      %v713 = vsel %vm649, %v617, %v681
      %v714 = vsel %vm650, %v618, %v682
      %v715 = vsel %vm651, %v619, %v683
      %v716 = vsel %vm652, %v620, %v684
      %v717 = vsel %vm653, %v621, %v685
      %v718 = vsel %vm654, %v622, %v686
      %v719 = vsel %vm655, %v623, %v687
      %v720 = vsel %vm656, %v624, %v688
      %v721 = vsel %vm657, %v625, %v689
      %v722 = vsel %vm658, %v626, %v690
      %v723 = vsel %vm659, %v627, %v691
      %v724 = vsel %vm660, %v628, %v692
      %v725 = vsel %vm661, %v629, %v693
      %v726 = vsel %vm662, %v630, %v694
      %v727 = vsel %vm663, %v631, %v695
      %v728 = vsel %vm664, %v632, %v696
      %v729 = vsel %vm665, %v633, %v697
      %v730 = vsel %vm666, %v634, %v698
      %v731 = vsel %vm667, %v635, %v699
      %v732 = vsel %vm668, %v636, %v700
      %v733 = vsel %vm669, %v637, %v701
      %734 = vst [vmem:[%s199] sm:$0xff] %v702
      %735 = vst [vmem:[%s199 + $0x8] sm:$0xff] %v703
      %736 = vst [vmem:[%s199 + $0x10] sm:$0xff] %v704
      %737 = vst [vmem:[%s199 + $0x18] sm:$0xff] %v705
      %738 = vst [vmem:[%s199 + $0x20] sm:$0xff] %v706
      %739 = vst [vmem:[%s199 + $0x28] sm:$0xff] %v707
      %740 = vst [vmem:[%s199 + $0x30] sm:$0xff] %v708
      %741 = vst [vmem:[%s199 + $0x38] sm:$0xff] %v709
      %742 = vst [vmem:[%s199 + $0x40] sm:$0xff] %v710
      %743 = vst [vmem:[%s199 + $0x48] sm:$0xff] %v711
      %744 = vst [vmem:[%s199 + $0x50] sm:$0xff] %v712
      %745 = vst [vmem:[%s199 + $0x58] sm:$0xff] %v713
      %746 = vst [vmem:[%s199 + $0x60] sm:$0xff] %v714
      %747 = vst [vmem:[%s199 + $0x68] sm:$0xff] %v715
      %748 = vst [vmem:[%s199 + $0x70] sm:$0xff] %v716
      %749 = vst [vmem:[%s199 + $0x78] sm:$0xff] %v717
      %750 = vst [vmem:[%s199 + $0x80] sm:$0xff] %v718
      %751 = vst [vmem:[%s199 + $0x88] sm:$0xff] %v719
      %752 = vst [vmem:[%s199 + $0x90] sm:$0xff] %v720
      %753 = vst [vmem:[%s199 + $0x98] sm:$0xff] %v721
      %754 = vst [vmem:[%s199 + $0xa0] sm:$0xff] %v722
      %755 = vst [vmem:[%s199 + $0xa8] sm:$0xff] %v723
      %756 = vst [vmem:[%s199 + $0xb0] sm:$0xff] %v724
      %757 = vst [vmem:[%s199 + $0xb8] sm:$0xff] %v725
      %758 = vst [vmem:[%s199 + $0xc0] sm:$0xff] %v726
      %759 = vst [vmem:[%s199 + $0xc8] sm:$0xff] %v727
      %760 = vst [vmem:[%s199 + $0xd0] sm:$0xff] %v728
      %761 = vst [vmem:[%s199 + $0xd8] sm:$0xff] %v729
      %762 = vst [vmem:[%s199 + $0xe0] sm:$0xff] %v730
      %763 = vst [vmem:[%s199 + $0xe8] sm:$0xff] %v731
      %764 = vst [vmem:[%s199 + $0xf0] sm:$0xff] %v732
      %765 = vst [vmem:[%s199 + $0xf8] sm:$0xff] %v733
      %s766 = smul.u32 32, %s15
      %p767 = scmp.lt.s32.totalorder %s766, 63
      %s768 = scalar_select %p767, %s766, 63
      %s769 = smul.addr %s768, 8
      %s770 = scalar_lea.vmem %s4, %s769
      // Predicated region
      $region37: #{conv_block_forward.3} parent=35 // pred_check
        %p771 = pneg %p122
      $region38: #{conv_block_forward.3} parent=35 // pred_check_branch
        %773 = sbr.rel (%p771) target = $region40
      $region39: #{conv_block_forward.3} parent=35 // pred_region
        %s774 = smul.u32 32, %s15
      $region40: #{conv_block_forward.3} parent=35 // pred_fallthru
        _
    $region36: #{conv_block_forward.3} parent=5 // pred_fallthru
      _
    %p775 = scmp.le.s32.totalorder 2, %s10
    // Predicated region
    $region41: #{conv_block_forward.3} parent=5 // pred_check
      %p776 = pneg %p775
    $region42: #{conv_block_forward.3} parent=5 // pred_check_branch
      %778 = sbr.rel (%p776) target = $region44
    $region43: #{conv_block_forward.3} parent=5 // pred_region
      %s779 = ssub.s32 %s10, 2
      // Predicated region
      $region45: #{conv_block_forward.3} parent=43 // pred_check
        %p780 = pneg %p128
      $region46: #{conv_block_forward.3} parent=43 // pred_check_branch
        %782 = sbr.rel (%p780) target = $region48
      $region47: #{conv_block_forward.3} parent=43 // pred_region
        %s783 = smul.u32 32, %s16
        %p784 = scmp.lt.s32.totalorder %s783, 63
        %s785 = scalar_select %p784, %s783, 63
        %s786 = smul.addr %s785, 8
        %s787 = scalar_lea.vmem %s4, %s786
      $region48: #{conv_block_forward.3} parent=43 // pred_fallthru
        _
    $region44: #{conv_block_forward.3} parent=5 // pred_fallthru
      _
  $region6: #{conv_block_forward.3} parent=0 // loop_footer
    %s14 = sadd.s32 1, %s10
  $region7: #{conv_block_forward.3} parent=0 // loop_footer_branch
    %9 = sbr.rel target = $region3
  $region8: #{conv_block_forward.3} parent=0 // loop_exit
    _

// kernel: conv_block_forward.2
$region0: #{conv_block_forward.2}
  #allocation0 [shape = 'u32[]', space=smem, size = 0x4, offset = 0x4, fixed_abs, tag = 'smem constant byte address 0x4 - core index']
  #allocation1 [shape = 'u32[144,128]{1,0:T(1,128)}', space=vmem, size = 0x12000, scoped, tag = 'internal scratch']
  %s0 = inlined_call_operand.vmem [shape: f32[512,40], index: 0, kind: input, shape index: {}]
  %s1 = inlined_call_operand.vmem [shape: f32[40,128], index: 1, kind: input, shape index: {}]
  %s2 = inlined_call_operand.vmem [shape: f32[2,2,128], index: 2, kind: output, shape index: {}]
  %s3 = sld [smem:[#allocation0]]
  $region41: #{conv_block_forward.2} parent=0
    _
  %s5 = ssub.s32 1, %s3
  %s6 = scalar_select 0, %s5, %s3
  loop: start=0, step=1, limit=4
  $region2: #{conv_block_forward.2} parent=0 // loop_pre_header
    _
  $region3: #{conv_block_forward.2} parent=0 // loop_header
    %s8 = sphi 0, %s12
    %p9 = scmp.ge.s32.totalorder %s8, 4
    %s18 = sphi 0, %s20
    %s21 = sphi 0, %s18
    %s22 = sphi 0, %s21
    %s38 = sphi 0, %s22
    %s42 = sphi 0, %s42
    %s44 = sphi 0, %s42
    %s45 = sphi 0, %s44
    %s59 = sphi 0, %s45
    %s65 = sphi 0, %s67
    %s68 = sphi 0, %s65
    %s69 = sphi 0, %s68
    %s85 = sphi 0, %s69
  $region4: #{conv_block_forward.2} parent=0 // loop_header_branch
    %11 = sbr.rel (%p9) target = $region8
  $region5: #{conv_block_forward.2} parent=0 // loop_body
    %s13 = ssub.s32 %s8, 1
    %s14 = ssub.s32 %s8, 2
    %s15 = sadd.s32 %s8, 1
    %s16 = ssub.s32 %s8, %s15
    %p17 = scmp.eq.s32.totalorder %s16, 0
    %s19 = sadd.s32 %s18, 1
    %s20 = scalar_select %p17, %s18, %s19
    %p23 = pneg %p17
    %p24 = scmp.eq.s32.totalorder %s8, 1
    %p25 = por %p23, %p24
    %p26 = scmp.ne.s32.totalorder %s18, %s21
    %p27 = scmp.eq.s32.totalorder %s8, 0
    %p28 = por %p26, %p27
    %p29 = scmp.ne.s32.totalorder %s18, %s21
    %p30 = scmp.eq.s32.totalorder %s13, 1
    %p31 = por %p29, %p30
    %p32 = scmp.ne.s32.totalorder %s21, %s22
    %p33 = scmp.eq.s32.totalorder %s13, 0
    %p34 = por %p32, %p33
    %p35 = scmp.ne.s32.totalorder %s21, %s22
    %p36 = scmp.eq.s32.totalorder %s14, 1
    %p37 = por %p35, %p36
    %p39 = scmp.ne.s32.totalorder %s22, %s38
    %p40 = scmp.eq.s32.totalorder %s14, 0
    %p41 = por %p39, %p40
    %s43 = sadd.s32 %s42, 1
    %p46 = scmp.eq.s32.totalorder %s8, 1
    %p47 = scmp.ne.s32.totalorder %s42, %s44
    %p48 = scmp.eq.s32.totalorder %s8, 0
    %p49 = por %p47, %p48
    %p50 = scmp.ne.s32.totalorder %s42, %s44
    %p51 = scmp.eq.s32.totalorder %s13, 1
    %p52 = por %p50, %p51
    %p53 = scmp.ne.s32.totalorder %s44, %s45
    %p54 = scmp.eq.s32.totalorder %s13, 0
    %p55 = por %p53, %p54
    %p56 = scmp.ne.s32.totalorder %s44, %s45
    %p57 = scmp.eq.s32.totalorder %s14, 1
    %p58 = por %p56, %p57
    %p60 = scmp.ne.s32.totalorder %s45, %s59
    %p61 = scmp.eq.s32.totalorder %s14, 0
    %p62 = por %p60, %p61
    %s63 = ssub.s32 %s8, %s15
    %p64 = scmp.eq.s32.totalorder %s63, 0
    %s66 = sadd.s32 %s65, 1
    %s67 = scalar_select %p64, %s65, %s66
    %p70 = pneg %p64
    %p71 = scmp.eq.s32.totalorder %s8, 1
    %p72 = por %p70, %p71
    %p73 = scmp.ne.s32.totalorder %s65, %s68
    %p74 = scmp.eq.s32.totalorder %s8, 0
    %p75 = por %p73, %p74
    %p76 = scmp.ne.s32.totalorder %s65, %s68
    %p77 = scmp.eq.s32.totalorder %s13, 1
    %p78 = por %p76, %p77
    %p79 = scmp.ne.s32.totalorder %s68, %s69
    %p80 = scmp.eq.s32.totalorder %s13, 0
    %p81 = por %p79, %p80
    %p82 = scmp.ne.s32.totalorder %s68, %s69
    %p83 = scmp.eq.s32.totalorder %s14, 1
    %p84 = por %p82, %p83
    %p86 = scmp.ne.s32.totalorder %s69, %s85
    %p87 = scmp.eq.s32.totalorder %s14, 0
    %p88 = por %p86, %p87
    %p89 = scmp.le.s32.totalorder 1, %s8
    %p90 = scmp.lt.s32.totalorder %s8, 3
    %p91 = pnand %p89, %p90
    %p92 = pneg %p91
    // Predicated region
    $region9: #{conv_block_forward.2} parent=5 // pred_check
      _
    $region10: #{conv_block_forward.2} parent=5 // pred_check_branch
      %94 = sbr.rel (%p91) target = $region12
    $region11: #{conv_block_forward.2} parent=5 // pred_region
      %s95 = ssub.s32 %s8, 1
      // Predicated region
      $region13: #{conv_block_forward.2} parent=11 // pred_check
        %p96 = pneg %p55
      $region14: #{conv_block_forward.2} parent=11 // pred_check_branch
        %98 = sbr.rel (%p96) target = $region16
      $region15: #{conv_block_forward.2} parent=11 // pred_region
        _
      $region16: #{conv_block_forward.2} parent=11 // pred_fallthru
        _
    $region12: #{conv_block_forward.2} parent=5 // pred_fallthru
      _
    %p99 = scmp.lt.s32.totalorder %s8, 2
    // Predicated region
    $region17: #{conv_block_forward.2} parent=5 // pred_check
      %p100 = pneg %p99
    $region18: #{conv_block_forward.2} parent=5 // pred_check_branch
      %102 = sbr.rel (%p100) target = $region20
    $region19: #{conv_block_forward.2} parent=5 // pred_region
      // Predicated region
      $region21: #{conv_block_forward.2} parent=19 // pred_check
        %p103 = pneg %p28
      $region22: #{conv_block_forward.2} parent=19 // pred_check_branch
        %105 = sbr.rel (%p103) target = $region24
      $region23: #{conv_block_forward.2} parent=19 // pred_region
        %s106 = smul.u32 32, %s8
        %p107 = scmp.lt.s32.totalorder %s106, 63
        %s108 = scalar_select %p107, %s106, 63
        %s109 = smul.addr %s108, 8
        %s110 = scalar_lea.vmem %s0, %s109
        %s111 = smul.u32 32, %s8
      $region24: #{conv_block_forward.2} parent=19 // pred_fallthru
        _
    $region20: #{conv_block_forward.2} parent=5 // pred_fallthru
      _
    %p112 = scmp.le.s32.totalorder 1, %s8
    %p113 = scmp.lt.s32.totalorder %s8, 3
    %p114 = pnand %p112, %p113
    %p115 = pneg %p114
    // Predicated region
    $region25: #{conv_block_forward.2} parent=5 // pred_check
      _
    $region26: #{conv_block_forward.2} parent=5 // pred_check_branch
      %117 = sbr.rel (%p114) target = $region28
    $region27: #{conv_block_forward.2} parent=5 // pred_region
      %s118 = ssub.s32 %s8, 1
      %s119 = smul.u32 32, %s13
      %p120 = scmp.lt.s32.totalorder %s119, 63
      %s121 = scalar_select %p120, %s119, 63
      %s122 = smul.addr %s121, 8
      %s123 = scalar_lea.vmem %s0, %s122
      %p124 = pneg %p34
      %p125 = pneg %p31
      %p126 = pneg %p55
      %p127 = pneg %p52
      %p128 = pneg %p81
      %p129 = pneg %p78
      %p130 = scmp.lt.s32.totalorder %s13, 1
      %s131 = scalar_select %p130, %s13, 1
      %s132 = smul.addr %s131, 2
      %s133 = scalar_lea.vmem %s2, %s132
      %s134 = smul.u32 32, %s13
      %p135 = scmp.lt.s32.totalorder %s134, 63
      %s136 = scalar_select %p135, %s134, 63
      %s137 = smul.addr %s136, 8
      %s138 = scalar_lea.vmem %s0, %s137
      %s139 = smul.u32 32, %s13
      %p140 = scmp.lt.s32.totalorder %s13, 1
      %s141 = scalar_select %p140, %s13, 1
      %s142 = smul.addr %s141, 2
      %s143 = scalar_lea.vmem %s2, %s142
      %v144 = vld [vmem:[%s138] sm:$0xff]
      %v145 = vld [vmem:[%s138 + $0x8] sm:$0xff]
      %v146 = vld [vmem:[%s138 + $0x10] sm:$0xff]
      %v147 = vld [vmem:[%s138 + $0x18] sm:$0xff]
      %v148 = vld [vmem:[%s138 + $0x20] sm:$0xff]
      %v149 = vld [vmem:[%s138 + $0x28] sm:$0xff]
      %v150 = vld [vmem:[%s138 + $0x30] sm:$0xff]
      %v151 = vld [vmem:[%s138 + $0x38] sm:$0xff]
      %v152 = vld [vmem:[%s138 + $0x40] sm:$0xff]
      %v153 = vld [vmem:[%s138 + $0x48] sm:$0xff]
      %v154 = vld [vmem:[%s138 + $0x50] sm:$0xff]
      %v155 = vld [vmem:[%s138 + $0x58] sm:$0xff]
      %v156 = vld [vmem:[%s138 + $0x60] sm:$0xff]
      %v157 = vld [vmem:[%s138 + $0x68] sm:$0xff]
      %v158 = vld [vmem:[%s138 + $0x70] sm:$0xff]
      %v159 = vld [vmem:[%s138 + $0x78] sm:$0xff]
      %v160 = vld [vmem:[%s138 + $0x80] sm:$0xff]
      %v161 = vld [vmem:[%s138 + $0x88] sm:$0xff]
      %v162 = vld [vmem:[%s138 + $0x90] sm:$0xff]
      %v163 = vld [vmem:[%s138 + $0x98] sm:$0xff]
      %v164 = vld [vmem:[%s138 + $0xa0] sm:$0xff]
      %v165 = vld [vmem:[%s138 + $0xa8] sm:$0xff]
      %v166 = vld [vmem:[%s138 + $0xb0] sm:$0xff]
      %v167 = vld [vmem:[%s138 + $0xb8] sm:$0xff]
      %v168 = vld [vmem:[%s138 + $0xc0] sm:$0xff]
      %v169 = vld [vmem:[%s138 + $0xc8] sm:$0xff]
      %v170 = vld [vmem:[%s138 + $0xd0] sm:$0xff]
      %v171 = vld [vmem:[%s138 + $0xd8] sm:$0xff]
      %v172 = vld [vmem:[%s138 + $0xe0] sm:$0xff]
      %v173 = vld [vmem:[%s138 + $0xe8] sm:$0xff]
      %v174 = vld [vmem:[%s138 + $0xf0] sm:$0xff]
      %v175 = vld [vmem:[%s138 + $0xf8] sm:$0xff]
      %v176 = vld [vmem:[%s1] sm:$0xff]
      %v177 = vld [vmem:[%s1 + $0x8] sm:$0xff]
      %v178 = vld [vmem:[%s1 + $0x10] sm:$0xff]
      %v179 = vld [vmem:[%s1 + $0x18] sm:$0xff]
      %v180 = vld [vmem:[%s1 + $0x20] sm:$0xff]
      %vm181 = vcmask 326656
      %v183 = vsel %vm181, %v144, 0
      %v186 = vsel %vm181, %v145, 0
      %v189 = vsel %vm181, %v146, 0
      %v192 = vsel %vm181, %v147, 0
      %v195 = vsel %vm181, %v148, 0
      %v198 = vsel %vm181, %v149, 0
      %v201 = vsel %vm181, %v150, 0
      %v204 = vsel %vm181, %v151, 0
      %v207 = vsel %vm181, %v152, 0
      %v210 = vsel %vm181, %v153, 0
      %v213 = vsel %vm181, %v154, 0
      %v216 = vsel %vm181, %v155, 0
      %v219 = vsel %vm181, %v156, 0
      %v222 = vsel %vm181, %v157, 0
      %v225 = vsel %vm181, %v158, 0
      %v228 = vsel %vm181, %v159, 0
      %v231 = vsel %vm181, %v160, 0
      %v234 = vsel %vm181, %v161, 0
      %v237 = vsel %vm181, %v162, 0
      %v240 = vsel %vm181, %v163, 0
      %v243 = vsel %vm181, %v164, 0
      %v246 = vsel %vm181, %v165, 0
      %v249 = vsel %vm181, %v166, 0
      %v252 = vsel %vm181, %v167, 0
      %v255 = vsel %vm181, %v168, 0
      %v258 = vsel %vm181, %v169, 0
      %v261 = vsel %vm181, %v170, 0
      %v264 = vsel %vm181, %v171, 0
      %v267 = vsel %vm181, %v172, 0
      %v270 = vsel %vm181, %v173, 0
      %v273 = vsel %vm181, %v174, 0
      %v276 = vsel %vm181, %v175, 0
      %278 = vmatprep.subr.mxu0 0.0
      %279 = vmatpush1.msra.mxu0 %v176
      %280 = vmatprep.subr.mxu0 0.0
      %281 = vmatpush1.msra.mxu0 %v177
      %282 = vmatprep.subr.mxu0 0.0
      %283 = vmatpush1.msra.mxu0 %v178
      %284 = vmatprep.subr.mxu0 0.0
      %285 = vmatpush1.msra.mxu0 %v179
      %286 = vmatprep.subr.mxu0 0.0
      %287 = vmatpush1.msra.mxu0 %v180
      %288 = vmatprep.subr.mxu0 0.0
      %289 = vmatpush1.msra.mxu0 0.0
      %290 = vmatprep.subr.mxu0 0.0
      %291 = vmatpush1.msra.mxu0 0.0
      %292 = vmatprep.subr.mxu0 0.0
      %293 = vmatpush1.msra.mxu0 0.0
      %294 = vmatprep.subr.mxu0 0.0
      %295 = vmatpush1.msra.mxu0 0.0
      %296 = vmatprep.subr.mxu0 0.0
      %297 = vmatpush1.msra.mxu0 0.0
      %298 = vmatprep.subr.mxu0 0.0
      %299 = vmatpush1.msra.mxu0 0.0
      %300 = vmatprep.subr.mxu0 0.0
      %301 = vmatpush1.msra.mxu0 0.0
      %302 = vmatprep.subr.mxu0 0.0
      %303 = vmatpush1.msra.mxu0 0.0
      %304 = vmatprep.subr.mxu0 0.0
      %305 = vmatpush1.msra.mxu0 0.0
      %306 = vmatprep.subr.mxu0 0.0
      %307 = vmatpush1.msra.mxu0 0.0
      %308 = vmatprep.subr.mxu0 0.0
      %309 = vmatpush1.msra.mxu0 0.0
      %310 = vmatprep.subr.mxu0 0.0
      %311 = vmatpush1.msra.mxu0 0.0
      %312 = vmatprep.subr.mxu0 0.0
      %313 = vmatpush1.msra.mxu0 0.0
      %314 = vmatprep.subr.mxu0 0.0
      %315 = vmatpush1.msra.mxu0 0.0
      %316 = vmatprep.subr.mxu0 0.0
      %317 = vmatpush1.msra.mxu0 0.0
      %318 = vmatprep.subr.mxu0 0.0
      %319 = vmatpush1.msra.mxu0 0.0
      %320 = vmatprep.subr.mxu0 0.0
      %321 = vmatpush1.msra.mxu0 0.0
      %322 = vmatprep.subr.mxu0 0.0
      %323 = vmatpush1.msra.mxu0 0.0
      %324 = vmatprep.subr.mxu0 0.0
      %325 = vmatpush1.msra.mxu0 0.0
      %326 = vmatprep.subr.mxu0 0.0
      %327 = vmatpush1.msra.mxu0 0.0
      %328 = vmatprep.subr.mxu0 0.0
      %329 = vmatpush1.msra.mxu0 0.0
      %330 = vmatprep.subr.mxu0 0.0
      %331 = vmatpush1.msra.mxu0 0.0
      %332 = vmatprep.subr.mxu0 0.0
      %333 = vmatpush1.msra.mxu0 0.0
      %334 = vmatprep.subr.mxu0 0.0
      %335 = vmatpush1.msra.mxu0 0.0
      %336 = vmatprep.subr.mxu0 0.0
      %337 = vmatpush1.msra.mxu0 0.0
      %338 = vmatprep.subr.mxu0 0.0
      %339 = vmatpush1.msra.mxu0 0.0
      %340 = vmatprep.subr.mxu0 0.0
      %341 = vmatpush1.msra.mxu0 0.0
      %342 = vmatprep.mubr.f32.mxu0 0.0
      %343 = vmatmul.mubr.f32.gmra.mrb[0].mxu0 %v183
      %v344 = vpop.f32.mrb[0].mxu0
      %v345 = vadd.f32 0.0, %v344
      %v346 = vpop.f32.mrb[0].mxu0
      %347 = vmatprep.mubr.f32.mxu0 0.0
      %348 = vmatmul.mubr.f32.gmra.mrb[0].mxu0 %v186
      %v349 = vpop.f32.mrb[0].mxu0
      %v350 = vadd.f32 0.0, %v349
      %v351 = vpop.f32.mrb[0].mxu0
      %352 = vmatprep.mubr.f32.mxu0 0.0
      %353 = vmatmul.mubr.f32.gmra.mrb[0].mxu0 %v189
      %v354 = vpop.f32.mrb[0].mxu0
      %v355 = vadd.f32 0.0, %v354
      %v356 = vpop.f32.mrb[0].mxu0
      %357 = vmatprep.mubr.f32.mxu0 0.0
      %358 = vmatmul.mubr.f32.gmra.mrb[0].mxu0 %v192
      %v359 = vpop.f32.mrb[0].mxu0
      %v360 = vadd.f32 0.0, %v359
      %v361 = vpop.f32.mrb[0].mxu0
      %362 = vmatprep.mubr.f32.mxu0 0.0
      %363 = vmatmul.mubr.f32.gmra.mrb[0].mxu0 %v195
      %v364 = vpop.f32.mrb[0].mxu0
      %v365 = vadd.f32 0.0, %v364
      %v366 = vpop.f32.mrb[0].mxu0
      %367 = vmatprep.mubr.f32.mxu0 0.0
      %368 = vmatmul.mubr.f32.gmra.mrb[0].mxu0 %v198
      %v369 = vpop.f32.mrb[0].mxu0
      %v370 = vadd.f32 0.0, %v369
      %v371 = vpop.f32.mrb[0].mxu0
      %372 = vmatprep.mubr.f32.mxu0 0.0
      %373 = vmatmul.mubr.f32.gmra.mrb[0].mxu0 %v201
      %v374 = vpop.f32.mrb[0].mxu0
      %v375 = vadd.f32 0.0, %v374
      %v376 = vpop.f32.mrb[0].mxu0
      %377 = vmatprep.mubr.f32.mxu0 0.0
      %378 = vmatmul.mubr.f32.gmra.mrb[0].mxu0 %v204
      %v379 = vpop.f32.mrb[0].mxu0
      %v380 = vadd.f32 0.0, %v379
      %v381 = vpop.f32.mrb[0].mxu0
      %382 = vmatprep.mubr.f32.mxu0 0.0
      %383 = vmatmul.mubr.f32.gmra.mrb[0].mxu0 %v207
      %v384 = vpop.f32.mrb[0].mxu0
      %v385 = vadd.f32 0.0, %v384
      %v386 = vpop.f32.mrb[0].mxu0
      %387 = vmatprep.mubr.f32.mxu0 0.0
      %388 = vmatmul.mubr.f32.gmra.mrb[0].mxu0 %v210
      %v389 = vpop.f32.mrb[0].mxu0
      %v390 = vadd.f32 0.0, %v389
      %v391 = vpop.f32.mrb[0].mxu0
      %392 = vmatprep.mubr.f32.mxu0 0.0
      %393 = vmatmul.mubr.f32.gmra.mrb[0].mxu0 %v213
      %v394 = vpop.f32.mrb[0].mxu0
      %v395 = vadd.f32 0.0, %v394
      %v396 = vpop.f32.mrb[0].mxu0
      %397 = vmatprep.mubr.f32.mxu0 0.0
      %398 = vmatmul.mubr.f32.gmra.mrb[0].mxu0 %v216
      %v399 = vpop.f32.mrb[0].mxu0
      %v400 = vadd.f32 0.0, %v399
      %v401 = vpop.f32.mrb[0].mxu0
      %402 = vmatprep.mubr.f32.mxu0 0.0
      %403 = vmatmul.mubr.f32.gmra.mrb[0].mxu0 %v219
      %v404 = vpop.f32.mrb[0].mxu0
      %v405 = vadd.f32 0.0, %v404
      %v406 = vpop.f32.mrb[0].mxu0
      %407 = vmatprep.mubr.f32.mxu0 0.0
      %408 = vmatmul.mubr.f32.gmra.mrb[0].mxu0 %v222
      %v409 = vpop.f32.mrb[0].mxu0
      %v410 = vadd.f32 0.0, %v409
      %v411 = vpop.f32.mrb[0].mxu0
      %412 = vmatprep.mubr.f32.mxu0 0.0
      %413 = vmatmul.mubr.f32.gmra.mrb[0].mxu0 %v225
      %v414 = vpop.f32.mrb[0].mxu0
      %v415 = vadd.f32 0.0, %v414
      %v416 = vpop.f32.mrb[0].mxu0
      %417 = vmatprep.mubr.f32.mxu0 0.0
      %418 = vmatmul.mubr.f32.gmra.mrb[0].mxu0 %v228
      %v419 = vpop.f32.mrb[0].mxu0
      %v420 = vadd.f32 0.0, %v419
      %v421 = vpop.f32.mrb[0].mxu0
      %422 = vmatprep.mubr.f32.mxu0 0.0
      %423 = vmatmul.mubr.f32.gmra.mrb[0].mxu0 %v231
      %v424 = vpop.f32.mrb[0].mxu0
      %v425 = vadd.f32 0.0, %v424
      %v426 = vpop.f32.mrb[0].mxu0
      %427 = vmatprep.mubr.f32.mxu0 0.0
      %428 = vmatmul.mubr.f32.gmra.mrb[0].mxu0 %v234
      %v429 = vpop.f32.mrb[0].mxu0
      %v430 = vadd.f32 0.0, %v429
      %v431 = vpop.f32.mrb[0].mxu0
      %432 = vmatprep.mubr.f32.mxu0 0.0
      %433 = vmatmul.mubr.f32.gmra.mrb[0].mxu0 %v237
      %v434 = vpop.f32.mrb[0].mxu0
      %v435 = vadd.f32 0.0, %v434
      %v436 = vpop.f32.mrb[0].mxu0
      %437 = vmatprep.mubr.f32.mxu0 0.0
      %438 = vmatmul.mubr.f32.gmra.mrb[0].mxu0 %v240
      %v439 = vpop.f32.mrb[0].mxu0
      %v440 = vadd.f32 0.0, %v439
      %v441 = vpop.f32.mrb[0].mxu0
      %442 = vmatprep.mubr.f32.mxu0 0.0
      %443 = vmatmul.mubr.f32.gmra.mrb[0].mxu0 %v243
      %v444 = vpop.f32.mrb[0].mxu0
      %v445 = vadd.f32 0.0, %v444
      %v446 = vpop.f32.mrb[0].mxu0
      %447 = vmatprep.mubr.f32.mxu0 0.0
      %448 = vmatmul.mubr.f32.gmra.mrb[0].mxu0 %v246
      %v449 = vpop.f32.mrb[0].mxu0
      %v450 = vadd.f32 0.0, %v449
      %v451 = vpop.f32.mrb[0].mxu0
      %452 = vmatprep.mubr.f32.mxu0 0.0
      %453 = vmatmul.mubr.f32.gmra.mrb[0].mxu0 %v249
      %v454 = vpop.f32.mrb[0].mxu0
      %v455 = vadd.f32 0.0, %v454
      %v456 = vpop.f32.mrb[0].mxu0
      %457 = vmatprep.mubr.f32.mxu0 0.0
      %458 = vmatmul.mubr.f32.gmra.mrb[0].mxu0 %v252
      %v459 = vpop.f32.mrb[0].mxu0
      %v460 = vadd.f32 0.0, %v459
      %v461 = vpop.f32.mrb[0].mxu0
      %462 = vmatprep.mubr.f32.mxu0 0.0
      %463 = vmatmul.mubr.f32.gmra.mrb[0].mxu0 %v255
      %v464 = vpop.f32.mrb[0].mxu0
      %v465 = vadd.f32 0.0, %v464
      %v466 = vpop.f32.mrb[0].mxu0
      %467 = vmatprep.mubr.f32.mxu0 0.0
      %468 = vmatmul.mubr.f32.gmra.mrb[0].mxu0 %v258
      %v469 = vpop.f32.mrb[0].mxu0
      %v470 = vadd.f32 0.0, %v469
      %v471 = vpop.f32.mrb[0].mxu0
      %472 = vmatprep.mubr.f32.mxu0 0.0
      %473 = vmatmul.mubr.f32.gmra.mrb[0].mxu0 %v261
      %v474 = vpop.f32.mrb[0].mxu0
      %v475 = vadd.f32 0.0, %v474
      %v476 = vpop.f32.mrb[0].mxu0
      %477 = vmatprep.mubr.f32.mxu0 0.0
      %478 = vmatmul.mubr.f32.gmra.mrb[0].mxu0 %v264
      %v479 = vpop.f32.mrb[0].mxu0
      %v480 = vadd.f32 0.0, %v479
      %v481 = vpop.f32.mrb[0].mxu0
      %482 = vmatprep.mubr.f32.mxu0 0.0
      %483 = vmatmul.mubr.f32.gmra.mrb[0].mxu0 %v267
      %v484 = vpop.f32.mrb[0].mxu0
      %v485 = vadd.f32 0.0, %v484
      %v486 = vpop.f32.mrb[0].mxu0
      %487 = vmatprep.mubr.f32.mxu0 0.0
      %488 = vmatmul.mubr.f32.gmra.mrb[0].mxu0 %v270
      %v489 = vpop.f32.mrb[0].mxu0
      %v490 = vadd.f32 0.0, %v489
      %v491 = vpop.f32.mrb[0].mxu0
      %492 = vmatprep.mubr.f32.mxu0 0.0
      %493 = vmatmul.mubr.f32.gmra.mrb[0].mxu0 %v273
      %v494 = vpop.f32.mrb[0].mxu0
      %v495 = vadd.f32 0.0, %v494
      %v496 = vpop.f32.mrb[0].mxu0
      %497 = vmatprep.mubr.f32.mxu0 0.0
      %498 = vmatmul.mubr.f32.gmra.mrb[0].mxu0 %v276
      %v499 = vpop.f32.mrb[0].mxu0
      %v500 = vadd.f32 0.0, %v499
      %v501 = vpop.f32.mrb[0].mxu0
      %502 = vdwg.mxu0
      %v503 = vadd.f32 %v345, %v350
      %v504 = vadd.f32 %v503, %v355
      %v505 = vadd.f32 %v504, %v360
      %v506 = vadd.f32 %v505, %v365
      %v507 = vadd.f32 %v506, %v370
      %v508 = vadd.f32 %v507, %v375
      %v509 = vadd.f32 %v508, %v380
      %v510 = vadd.f32 %v509, %v385
      %v511 = vadd.f32 %v510, %v390
      %v512 = vadd.f32 %v511, %v395
      %v513 = vadd.f32 %v512, %v400
      %v514 = vadd.f32 %v513, %v405
      %v515 = vadd.f32 %v514, %v410
      %v516 = vadd.f32 %v515, %v415
      %v517 = vadd.f32 %v516, %v420
      %v518 = vadd.f32 %v517, %v425
      %v519 = vadd.f32 %v518, %v430
      %v520 = vadd.f32 %v519, %v435
      %v521 = vadd.f32 %v520, %v440
      %v522 = vadd.f32 %v521, %v445
      %v523 = vadd.f32 %v522, %v450
      %v524 = vadd.f32 %v523, %v455
      %v525 = vadd.f32 %v524, %v460
      %v526 = vadd.f32 %v525, %v465
      %v527 = vadd.f32 %v526, %v470
      %v528 = vadd.f32 %v527, %v475
      %v529 = vadd.f32 %v528, %v480
      %v530 = vadd.f32 %v529, %v485
      %v531 = vadd.f32 %v530, %v490
      %v532 = vadd.f32 %v531, %v495
      %v533 = vadd.f32 %v532, %v500
      %v534 = vrot.slane %v533, 4
      %v535 = vadd.f32 %v533, %v534
      %v536 = vrot.slane %v535, 2
      %v537 = vadd.f32 %v535, %v536
      %v538 = vrot.slane %v537, 1
      %v539 = vadd.f32 %v537, %v538
      %v540 = vmul.f32 %v345, %v345
      %v541 = vmul.f32 %v350, %v350
      %v542 = vmul.f32 %v355, %v355
      %v543 = vmul.f32 %v360, %v360
      %v544 = vmul.f32 %v365, %v365
      %v545 = vmul.f32 %v370, %v370
      %v546 = vmul.f32 %v375, %v375
      %v547 = vmul.f32 %v380, %v380
      %v548 = vmul.f32 %v385, %v385
      %v549 = vmul.f32 %v390, %v390
      %v550 = vmul.f32 %v395, %v395
      %v551 = vmul.f32 %v400, %v400
      %v552 = vmul.f32 %v405, %v405
      %v553 = vmul.f32 %v410, %v410
      %v554 = vmul.f32 %v415, %v415
      %v555 = vmul.f32 %v420, %v420
      %v556 = vmul.f32 %v425, %v425
      %v557 = vmul.f32 %v430, %v430
      %v558 = vmul.f32 %v435, %v435
      %v559 = vmul.f32 %v440, %v440
      %v560 = vmul.f32 %v445, %v445
      %v561 = vmul.f32 %v450, %v450
      %v562 = vmul.f32 %v455, %v455
      %v563 = vmul.f32 %v460, %v460
      %v564 = vmul.f32 %v465, %v465
      %v565 = vmul.f32 %v470, %v470
      %v566 = vmul.f32 %v475, %v475
      %v567 = vmul.f32 %v480, %v480
      %v568 = vmul.f32 %v485, %v485
      %v569 = vmul.f32 %v490, %v490
      %v570 = vmul.f32 %v495, %v495
      %v571 = vmul.f32 %v500, %v500
      %v572 = vadd.f32 %v540, %v541
      %v573 = vadd.f32 %v572, %v542
      %v574 = vadd.f32 %v573, %v543
      %v575 = vadd.f32 %v574, %v544
      %v576 = vadd.f32 %v575, %v545
      %v577 = vadd.f32 %v576, %v546
      %v578 = vadd.f32 %v577, %v547
      %v579 = vadd.f32 %v578, %v548
      %v580 = vadd.f32 %v579, %v549
      %v581 = vadd.f32 %v580, %v550
      %v582 = vadd.f32 %v581, %v551
      %v583 = vadd.f32 %v582, %v552
      %v584 = vadd.f32 %v583, %v553
      %v585 = vadd.f32 %v584, %v554
      %v586 = vadd.f32 %v585, %v555
      %v587 = vadd.f32 %v586, %v556
      %v588 = vadd.f32 %v587, %v557
      %v589 = vadd.f32 %v588, %v558
      %v590 = vadd.f32 %v589, %v559
      %v591 = vadd.f32 %v590, %v560
      %v592 = vadd.f32 %v591, %v561
      %v593 = vadd.f32 %v592, %v562
      %v594 = vadd.f32 %v593, %v563
      %v595 = vadd.f32 %v594, %v564
      %v596 = vadd.f32 %v595, %v565
      %v597 = vadd.f32 %v596, %v566
      %v598 = vadd.f32 %v597, %v567
      %v599 = vadd.f32 %v598, %v568
      %v600 = vadd.f32 %v599, %v569
      %v601 = vadd.f32 %v600, %v570
      %v602 = vadd.f32 %v601, %v571
      %v603 = vrot.slane %v602, 4
      %v604 = vadd.f32 %v602, %v603
      %v605 = vrot.slane %v604, 2
      %v606 = vadd.f32 %v604, %v605
      %v607 = vrot.slane %v606, 1
      %v608 = vadd.f32 %v606, %v607
      %vm609 = vcmask 1040384
      %v610 = vsel %vm609, %v539, %v608
      %611 = vst [vmem:[%s143] sm:$0x3] %v610
      %p612 = scmp.lt.s32.totalorder %s13, 1
      %s613 = scalar_select %p612, %s13, 1
      %s614 = smul.addr %s613, 2
      %s615 = scalar_lea.vmem %s2, %s614
      // Predicated region
      $region29: #{conv_block_forward.2} parent=27 // pred_check
        %p616 = pneg %p78
      $region30: #{conv_block_forward.2} parent=27 // pred_check_branch
        %618 = sbr.rel (%p616) target = $region32
      $region31: #{conv_block_forward.2} parent=27 // pred_region
        _
      $region32: #{conv_block_forward.2} parent=27 // pred_fallthru
        _
    $region28: #{conv_block_forward.2} parent=5 // pred_fallthru
      _
    %p619 = scmp.le.s32.totalorder 2, %s8
    // Predicated region
    $region33: #{conv_block_forward.2} parent=5 // pred_check
      %p620 = pneg %p619
    $region34: #{conv_block_forward.2} parent=5 // pred_check_branch
      %622 = sbr.rel (%p620) target = $region36
    $region35: #{conv_block_forward.2} parent=5 // pred_region
      %s623 = ssub.s32 %s8, 2
      // Predicated region
      $region37: #{conv_block_forward.2} parent=35 // pred_check
        %p624 = pneg %p84
      $region38: #{conv_block_forward.2} parent=35 // pred_check_branch
        %626 = sbr.rel (%p624) target = $region40
      $region39: #{conv_block_forward.2} parent=35 // pred_region
        %p627 = scmp.lt.s32.totalorder %s14, 1
        %s628 = scalar_select %p627, %s14, 1
        %s629 = smul.addr %s628, 2
        %s630 = scalar_lea.vmem %s2, %s629
      $region40: #{conv_block_forward.2} parent=35 // pred_fallthru
        _
    $region36: #{conv_block_forward.2} parent=5 // pred_fallthru
      _
  $region6: #{conv_block_forward.2} parent=0 // loop_footer
    %s12 = sadd.s32 1, %s8
  $region7: #{conv_block_forward.2} parent=0 // loop_footer_branch
    %7 = sbr.rel target = $region3
  $region8: #{conv_block_forward.2} parent=0 // loop_exit
    _

</llo_original>
